<compile_context>
chip_gen: v7x
topology: tpu7x:2x2x1
jax: 0.10.0
libtpu: 0.0.40
codegen_flags: <defaults>
</compile_context>

<pallas_src>
import functools

import jax
import jax.numpy as jnp
from jax import lax
from jax.experimental import pallas as pl
from jax.experimental.pallas import tpu as pltpu


def _round_up(x, m):
    return (x + m - 1) // m * m


# ---------------------------------------------------------------------------
# Kernels
# ---------------------------------------------------------------------------

def _self_attn_c_kernel_single(x_ref, wqkv_ref, bqkv_ref, wo_ref, bo_ref,
                               gamma_ref, o_ref, *, cl, clp, hw_valid, bt):
    """One grid step = `bt` batch elements, full (C, HWp) spatial extent."""
    mx = wqkv_ref.dtype                         # MXU operand dtype (bf16)
    hwp = x_ref.shape[-1]
    gamma = gamma_ref[0]

    for b in range(bt):                         # static unroll (bt is small)
        x_t = x_ref[b]                          # (C, HWp) bf16 -> MXU directly
        # Fused Q/K/V projection: one (3Clp, C) @ (C, HWp) matmul, f32 accum.
        qkv = jnp.dot(wqkv_ref[...], x_t, preferred_element_type=jnp.float32)
        qkv = (qkv + bqkv_ref[...]).astype(mx)  # single f32->bf16 cast
        q = qkv[0:clp, :]                       # aligned (16,128)-tile views
        k = qkv[clp:2 * clp, :]
        v = qkv[2 * clp:3 * clp, :]

        if hw_valid != hwp:
            # spatial zero-padding: kill the bias contribution in the HW sum
            col = lax.broadcasted_iota(jnp.int32, (clp, hwp), 1)
            k = jnp.where(col < hw_valid, k, jnp.zeros_like(k))

        # energy[i, j] = sum_n k[i, n] * q[j, n]   (standard k @ q^T pattern;
        # verify via pl.lower_as_mlir that Mosaic does not insert a full
        # (Clp,HWp) transpose -- the HW-tiled path sidesteps this for big HW).
        energy = lax.dot_general(k, q, (((1,), (1,)), ((), ())),
                                 preferred_element_type=jnp.float32)  # (Clp,Clp)
        if clp != cl:
            ccol = lax.broadcasted_iota(jnp.int32, (clp, clp), 1)
            energy = jnp.where(ccol < cl, energy, -1e30)   # mask padded channels

        energy = energy - jnp.max(energy, axis=-1, keepdims=True)
        e = jnp.exp(energy)
        inv = pl.reciprocal(jnp.sum(e, axis=-1, keepdims=True), approx=True)
        attn = (e * inv).astype(mx)                                   # (Clp,Clp)

        # att_out[i, n] = sum_j attn[j, i] * v[j, n]  == attn^T @ V
        att_out = lax.dot_general(attn, v, (((0,), (0,)), ((), ())),
                                  preferred_element_type=jnp.float32)  # (Clp,HWp)
        out = jnp.dot(wo_ref[...], att_out.astype(mx),
                      preferred_element_type=jnp.float32) + bo_ref[...]  # (C,HWp)
        # gamma-residual in f32, stored in the (bf16) output dtype, lane-dense.
        o_ref[b] = (gamma * out + x_ref[b].astype(jnp.float32)).astype(o_ref.dtype)


def _self_attn_c_kernel_tiled(x_ref, wqkv_ref, bqkv_ref, wo_ref, bo_ref,
                              gamma_ref, o_ref, eacc_ref, *,
                              cl, clp, hw_valid, hwp, hw_tile):
    """Two-phase HW-tiled kernel.  Grid = (B, 2, n_tiles); the batch axis is
    parallel (megacore), phase/tile axes are arbitrary (sequential on a core).
      phase 0: per x tile compute q,k and accumulate energy into VMEM scratch.
      phase 1: softmax once (t==0), then per tile recompute v from the
               re-streamed x tile, attn^T@V, output conv, residual, store."""
    mx = wqkv_ref.dtype
    phase = pl.program_id(1)
    t = pl.program_id(2)

    @pl.when(phase == 0)
    def _phase0():
        @pl.when(t == 0)
        def _init():
            eacc_ref[...] = jnp.zeros_like(eacc_ref)

        x_t = x_ref[...]                                        # (C, tHW) bf16
        qk = jnp.dot(wqkv_ref[0:2 * clp, :], x_t,
                     preferred_element_type=jnp.float32) + bqkv_ref[0:2 * clp, :]
        qk = qk.astype(mx)
        q = qk[0:clp, :]
        k = qk[clp:2 * clp, :]
        if hwp != hw_valid:
            col = t * hw_tile + lax.broadcasted_iota(jnp.int32, (clp, hw_tile), 1)
            k = jnp.where(col < hw_valid, k, jnp.zeros_like(k))
        eacc_ref[...] += lax.dot_general(k, q, (((1,), (1,)), ((), ())),
                                         preferred_element_type=jnp.float32)

    @pl.when(phase == 1)
    def _phase1():
        @pl.when(t == 0)
        def _softmax():
            energy = eacc_ref[...]
            if clp != cl:
                ccol = lax.broadcasted_iota(jnp.int32, (clp, clp), 1)
                energy = jnp.where(ccol < cl, energy, -1e30)
            energy = energy - jnp.max(energy, axis=-1, keepdims=True)
            e = jnp.exp(energy)
            inv = pl.reciprocal(jnp.sum(e, axis=-1, keepdims=True), approx=True)
            eacc_ref[...] = e * inv          # scratch now holds attn (f32)

        x_t = x_ref[...]                                        # (C, tHW) bf16
        v = (jnp.dot(wqkv_ref[2 * clp:3 * clp, :], x_t,
                     preferred_element_type=jnp.float32)
             + bqkv_ref[2 * clp:3 * clp, :]).astype(mx)         # (Clp, tHW)
        attn = eacc_ref[...].astype(mx)
        att_out = lax.dot_general(attn, v, (((0,), (0,)), ((), ())),
                                  preferred_element_type=jnp.float32)  # (Clp,tHW)
        out = jnp.dot(wo_ref[...], att_out.astype(mx),
                      preferred_element_type=jnp.float32) + bo_ref[...]  # (C,tHW)
        o_ref[...] = (gamma_ref[0] * out
                      + x_t.astype(jnp.float32)).astype(o_ref.dtype)


# ---------------------------------------------------------------------------
# Parameter packing (one-time, hoisted out of the forward path)
# ---------------------------------------------------------------------------

def pack_params(params, *, matmul_dtype=jnp.bfloat16, sublane_pad=16):
    """Fuse Wq/Wk/Wv into one (3*Clp, C) matrix; each Cl-row block is zero-padded
    to a multiple of `sublane_pad` rows so in-kernel q/k/v slices are
    (16,128)-tile aligned views.  Weights pre-cast to the MXU dtype; biases f32."""
    Cl, C = params["wq"].shape
    Clp = _round_up(Cl, sublane_pad)

    def padw(w):
        return jnp.pad(w, ((0, Clp - Cl), (0, 0)))

    def padb(b):
        return jnp.pad(b, (0, Clp - Cl))

    w_qkv = jnp.concatenate([padw(params["wq"]), padw(params["wk"]),
                             padw(params["wv"])], axis=0).astype(matmul_dtype)
    b_qkv = jnp.concatenate([padb(params["bq"]), padb(params["bk"]),
                             padb(params["bv"])],
                            axis=0).reshape(3 * Clp, 1).astype(jnp.float32)
    w_o = jnp.pad(params["wo"], ((0, 0), (0, Clp - Cl))).astype(matmul_dtype)
    b_o = params["bo"].reshape(C, 1).astype(jnp.float32)
    return {"w_qkv": w_qkv, "b_qkv": b_qkv, "w_o": w_o, "b_o": b_o,
            "gamma": params["gamma"].astype(jnp.float32), "cl": int(Cl)}


# ---------------------------------------------------------------------------
# Wrapper
# ---------------------------------------------------------------------------

def self_attn_c(x_nchw, packed, *, hw_tile=None, out_dtype=None,
                vmem_budget_bytes=40 * 2**20):
    B, C, H, W = x_nchw.shape
    HW = H * W
    HWp = _round_up(HW, 128)                       # lane-dense spatial dim
    cl = packed["cl"]
    w_qkv, b_qkv = packed["w_qkv"], packed["b_qkv"]
    w_o, b_o, gamma = packed["w_o"], packed["b_o"], packed["gamma"]
    clp = w_qkv.shape[0] // 3
    mx_dtype = w_qkv.dtype

    if out_dtype is None:
        out_dtype = x_nchw.dtype                   # bf16 in / bf16 out by default

    # Channel-first flattening is a pure reshape (no transpose, no HBM pass).
    x_flat = x_nchw.reshape(B, C, HW)
    if x_flat.dtype != mx_dtype:
        # NOTE: in a real model keep activations bf16 end-to-end so this cast
        # lives with the producer instead of being a standalone HBM pass.
        x_flat = x_flat.astype(mx_dtype)
    if HWp != HW:
        x_flat = jnp.pad(x_flat, ((0, 0), (0, 0), (0, HWp - HW)))

    in_bytes = x_flat.dtype.itemsize
    out_bytes = jnp.dtype(out_dtype).itemsize
    w_total_bytes = (w_qkv.size * w_qkv.dtype.itemsize
                     + w_o.size * w_o.dtype.itemsize
                     + (b_qkv.size + b_o.size) * 4)

    def single_block_vmem(bt):
        x_blk = bt * C * HWp * in_bytes
        o_blk = bt * C * HWp * out_bytes
        inter = (3 * clp * HWp * (4 + 2)           # qkv f32 + bf16 copy
                 + clp * HWp * 4                   # att_out f32
                 + C * HWp * 4)                    # out f32 before residual
        return 2 * (x_blk + o_blk) + 2 * w_total_bytes + inter

    use_tiled = hw_tile is not None
    bt = 1
    if not use_tiled:
        if single_block_vmem(1) > vmem_budget_bytes:
            use_tiled = True                       # full-extent block blows VMEM
        else:
            # Batch-block to amortize per-grid-step overhead, but keep >=2
            # parallel blocks so both v7x TensorCores get work when B >= 2.
            max_bt = max(1, B // 2)
            for cand in (8, 4, 2):
                if (cand <= max_bt and B % cand == 0
                        and single_block_vmem(cand) <= vmem_budget_bytes):
                    bt = cand
                    break

    if use_tiled:
        if hw_tile is None:
            for cand in (2048, 1024, 512, 256, 128):
                if HWp % cand == 0:
                    hw_tile = cand
                    break
        assert HWp % hw_tile == 0 and hw_tile % 128 == 0
        n_t = HWp // hw_tile
        kernel = functools.partial(_self_attn_c_kernel_tiled, cl=cl, clp=clp,
                                   hw_valid=HW, hwp=HWp, hw_tile=hw_tile)
        grid = (B, 2, n_t)
        in_specs = [
            pl.BlockSpec((None, C, hw_tile), lambda b, p, t: (b, 0, t)),
            pl.BlockSpec((3 * clp, C), lambda b, p, t: (0, 0)),
            pl.BlockSpec((3 * clp, 1), lambda b, p, t: (0, 0)),
            pl.BlockSpec((C, clp), lambda b, p, t: (0, 0)),
            pl.BlockSpec((C, 1), lambda b, p, t: (0, 0)),
            pl.BlockSpec(memory_space=pltpu.MemorySpace.SMEM),      # gamma scalar
        ]
        # Phase 0 parks the output window on tile 0 (index p*t), so nothing is
        # written back until phase 1 has filled the block with real data.
        out_specs = pl.BlockSpec((None, C, hw_tile), lambda b, p, t: (b, 0, p * t))
        scratch_shapes = [pltpu.VMEM((clp, clp), jnp.float32)]
        dimension_semantics = ("parallel", "arbitrary", "arbitrary")
        blk_bytes = (2 * C * hw_tile * (in_bytes + out_bytes) + 2 * w_total_bytes
                     + 3 * clp * hw_tile * 6 + C * hw_tile * 4 + clp * clp * 4)
        x_reads = 2                                # x streamed once per phase
    else:
        kernel = functools.partial(_self_attn_c_kernel_single, cl=cl, clp=clp,
                                   hw_valid=HW, bt=bt)
        grid = (B // bt,)
        in_specs = [
            pl.BlockSpec((bt, C, HWp), lambda b: (b, 0, 0)),
            pl.BlockSpec((3 * clp, C), lambda b: (0, 0)),
            pl.BlockSpec((3 * clp, 1), lambda b: (0, 0)),
            pl.BlockSpec((C, clp), lambda b: (0, 0)),
            pl.BlockSpec((C, 1), lambda b: (0, 0)),
            pl.BlockSpec(memory_space=pltpu.MemorySpace.SMEM),      # gamma scalar
        ]
        out_specs = pl.BlockSpec((bt, C, HWp), lambda b: (b, 0, 0))
        scratch_shapes = []
        dimension_semantics = ("parallel",)
        blk_bytes = single_block_vmem(bt)
        x_reads = 1

    # Explicit scoped-VMEM limit sized from actual block footprint (defaults of
    # 16 MiB v5e / 32 MiB v6e-v7x under-buffer large blocks); cap <= 56 MiB so
    # it stays under v7x's 64 MiB physical VMEM.
    vmem_limit = int(min(max(blk_bytes * 1.5, 32 * 2**20), 56 * 2**20))

    flops = 2 * B * HWp * (3 * clp * C + 2 * clp * clp + clp * C)
    bytes_accessed = (x_reads * B * C * HWp * in_bytes
                      + B * C * HWp * out_bytes + w_total_bytes)

    out_flat = pl.pallas_call(
        kernel,
        out_shape=jax.ShapeDtypeStruct((B, C, HWp), out_dtype),
        grid=grid,
        in_specs=in_specs,
        out_specs=out_specs,
        scratch_shapes=scratch_shapes,
        compiler_params=pltpu.CompilerParams(
            dimension_semantics=dimension_semantics,
            vmem_limit_bytes=vmem_limit),
        cost_estimate=pl.CostEstimate(flops=flops,
                                      transcendentals=B * clp * clp,
                                      bytes_accessed=bytes_accessed),
    )(x_flat, w_qkv, b_qkv, w_o, b_o, gamma)

    if HWp != HW:
        out_flat = out_flat[:, :, :HW]
    return out_flat.reshape(B, C, H, W)


# ---------------------------------------------------------------------------
# Init + pure-JAX reference
# ---------------------------------------------------------------------------

def init_params(key, C, r=8):
    """Deterministic init mirroring nn.Conv2d default (uniform +-1/sqrt(fan_in)).
    Weights stored (out_channels, in_channels); biases 1-D (out,)."""
    Cl = C // r
    ks = jax.random.split(key, 8)

    def u(k, shape, fan_in):
        bound = 1.0 / jnp.sqrt(jnp.float32(fan_in))
        return jax.random.uniform(k, shape, jnp.float32, -bound, bound)

    return {
        "wq": u(ks[0], (Cl, C), C), "bq": u(ks[1], (Cl,), C),
        "wk": u(ks[2], (Cl, C), C), "bk": u(ks[3], (Cl,), C),
        "wv": u(ks[4], (Cl, C), C), "bv": u(ks[5], (Cl,), C),
        "wo": u(ks[6], (C, Cl), Cl), "bo": u(ks[7], (C,), Cl),
        # PyTorch default is zeros (out == x); use a nonzero value in the test
        # so the attention path is actually exercised.
        "gamma": jnp.array([0.5], dtype=jnp.float32),
    }


def ref_forward(x, p, matmul_dtype=jnp.float32):
    """Pure-JAX reference reproducing the PyTorch forward (NCHW); `matmul_dtype`
    applies the same matmul-operand rounding as the kernel."""
    B, C, H, W = x.shape
    HW = H * W
    xf = x.reshape(B, C, HW)
    md = matmul_dtype

    def conv1x1(inp, w, b):
        y = jnp.einsum('oi,bin->bon', w.astype(md), inp.astype(md),
                       preferred_element_type=jnp.float32)
        return y + b.reshape(1, -1, 1)

    q = conv1x1(xf, p["wq"], p["bq"])
    k = conv1x1(xf, p["wk"], p["bk"])
    v = conv1x1(xf, p["wv"], p["bv"])
    energy = jnp.einsum('bin,bjn->bij', k.astype(md), q.astype(md),
                        preferred_element_type=jnp.float32)
    attn = jax.nn.softmax(energy, axis=-1)
    att_out = jnp.einsum('bji,bjn->bin', attn.astype(md), v.astype(md),
                         preferred_element_type=jnp.float32)
    out = conv1x1(att_out, p["wo"], p["bo"])
    out = p["gamma"][0] * out + xf
    return out.reshape(B, C, H, W)


def _check(name, out, ref, atol=2e-2, rtol=2e-2):
    out = out.astype(jnp.float32)
    assert out.shape == ref.shape, f"{name}: shape {out.shape} vs {ref.shape}"
    err = float(jnp.max(jnp.abs(out - ref)))
    assert bool(jnp.allclose(out, ref, atol=atol, rtol=rtol)), \
        f"{name}: mismatch vs reference (max abs err {err:.4e})"


# ---------------------------------------------------------------------------
# Test
# ---------------------------------------------------------------------------

if __name__ == "__main__":
    key = jax.random.PRNGKey(0)
    kx, kp, kx2 = jax.random.split(key, 3)

    # in_dim=32, r=8 -> channel_latent = 4 (padded to 16 in the packed weights)
    B, C, H, W = 2, 32, 16, 16
    params = init_params(kp, C, r=8)
    packed = pack_params(params)                 # one-time weight fusion/packing

    # bf16 activations (the cast belongs to the producer in a real model).
    x = jax.random.normal(kx, (B, C, H, W), jnp.float32).astype(jnp.bfloat16)
    x_f32 = x.astype(jnp.float32)                # exact values the kernel sees
    ref_bf = ref_forward(x_f32, params, matmul_dtype=jnp.bfloat16)
    ref_f32 = ref_forward(x_f32, params, matmul_dtype=jnp.float32)

    # 1) default path: single full-spatial block per grid step
    out = jax.block_until_ready(self_attn_c(x, packed))
    assert out.shape == (B, C, H, W) and out.dtype == jnp.bfloat16
    _check("single-block", out, ref_bf)
    rel = jnp.linalg.norm(out.astype(jnp.float32) - ref_f32) / jnp.linalg.norm(ref_f32)
    assert float(rel) < 5e-2, f"excessive drift vs f32 reference: {float(rel)}"

    # 2) force the two-phase HW-tiled path (what large C*HW shapes use)
    out_t = jax.block_until_ready(self_attn_c(x, packed, hw_tile=128))
    _check("hw-tiled", out_t, ref_bf)

    # 3) non-multiple-of-128 spatial size (H*W=100 -> padded/masked to 128)
    #    and batch-blocking (B=4 -> 2 elements per grid step).
    B2, H2, W2 = 4, 10, 10
    x2 = jax.random.normal(kx2, (B2, C, H2, W2), jnp.float32).astype(jnp.bfloat16)
    ref2 = ref_forward(x2.astype(jnp.float32), params, matmul_dtype=jnp.bfloat16)
    out2 = jax.block_until_ready(self_attn_c(x2, packed))
    _check("padded single-block", out2, ref2)

    # 4) padded spatial size through the tiled path as well
    out2t = jax.block_until_ready(self_attn_c(x2, packed, hw_tile=128))
    _check("padded hw-tiled", out2t, ref2)

    print("KERNEL_OK")
</pallas_src>

<mosaic_0001>
module attributes {stable_mosaic.version = 11 : i64} {
  func.func @_self_attn_c_kernel_single(%arg0: i32, %arg1: memref<1x32x256xbf16, #tpu.memory_space<vmem>>, %arg2: memref<48x32xbf16, #tpu.memory_space<vmem>>, %arg3: memref<48x1xf32, #tpu.memory_space<vmem>>, %arg4: memref<32x16xbf16, #tpu.memory_space<vmem>>, %arg5: memref<32x1xf32, #tpu.memory_space<vmem>>, %arg6: memref<1xf32, #tpu.memory_space<smem>>, %arg7: memref<1x32x256xbf16, #tpu.memory_space<vmem>>) attributes {dimension_semantics = [#tpu.dimension_semantics<parallel>], iteration_bounds = array<i64: 2>, scalar_prefetch = 0 : i64, scratch_operands = 0 : i64, tpu.core_type = #tpu.core_type<tc>, window_params = [{transform_indices = @transform_0, window_bounds = array<i64: 1, 32, 256>}, {pipeline_mode = #tpu.pipeline_mode<synchronous>, transform_indices = @transform_1, window_bounds = array<i64: 48, 32>}, {pipeline_mode = #tpu.pipeline_mode<synchronous>, transform_indices = @transform_2, window_bounds = array<i64: 48, 1>}, {pipeline_mode = #tpu.pipeline_mode<synchronous>, transform_indices = @transform_3, window_bounds = array<i64: 32, 16>}, {pipeline_mode = #tpu.pipeline_mode<synchronous>, transform_indices = @transform_4, window_bounds = array<i64: 32, 1>}, {transform_indices = @transform_5, window_bounds = array<i64: 1>}, {transform_indices = @transform_6, window_bounds = array<i64: 1, 32, 256>}]} {
    %c0 = arith.constant 0 : index
    %0 = memref.load %arg6[%c0] : memref<1xf32, #tpu.memory_space<smem>>
    %c0_0 = arith.constant 0 : index
    %c0_1 = arith.constant 0 : index
    %c0_2 = arith.constant 0 : index
    %1 = vector.load %arg1[%c0_0, %c0_1, %c0_2] : memref<1x32x256xbf16, #tpu.memory_space<vmem>>, vector<1x32x256xbf16>
    %2 = vector.shape_cast %1 : vector<1x32x256xbf16> to vector<32x256xbf16>
    %c0_3 = arith.constant 0 : index
    %c0_4 = arith.constant 0 : index
    %3 = vector.load %arg2[%c0_3, %c0_4] : memref<48x32xbf16, #tpu.memory_space<vmem>>, vector<48x32xbf16>
    %cst = arith.constant dense<0.000000e+00> : vector<48x256xf32>
    %4 = tpu.matmul %3, %2, %cst {dimension_numbers = #tpu.dot_dimension_numbers<[1], [0], [0], [1], [0, 0, 1, 1], [], []>} : vector<48x32xbf16>, vector<32x256xbf16>, vector<48x256xf32> -> vector<48x256xf32>
    %c0_5 = arith.constant 0 : index
    %c0_6 = arith.constant 0 : index
    %5 = vector.load %arg3[%c0_5, %c0_6] : memref<48x1xf32, #tpu.memory_space<vmem>>, vector<48x1xf32>
    %6 = vector.broadcast %5 : vector<48x1xf32> to vector<48x256xf32>
    %7 = arith.addf %4, %6 : vector<48x256xf32>
    %8 = arith.truncf %7 : vector<48x256xf32> to vector<48x256xbf16>
    %9 = vector.extract_strided_slice %8 {offsets = [0, 0], sizes = [16, 256], strides = [1, 1]} : vector<48x256xbf16> to vector<16x256xbf16>
    %10 = vector.extract_strided_slice %8 {offsets = [16, 0], sizes = [16, 256], strides = [1, 1]} : vector<48x256xbf16> to vector<16x256xbf16>
    %11 = vector.extract_strided_slice %8 {offsets = [32, 0], sizes = [16, 256], strides = [1, 1]} : vector<48x256xbf16> to vector<16x256xbf16>
    %cst_7 = arith.constant dense<0.000000e+00> : vector<16x16xf32>
    %12 = tpu.matmul %10, %9, %cst_7 {dimension_numbers = #tpu.dot_dimension_numbers<[1], [1], [0], [0], [0, 0, 1, 0], [], []>} : vector<16x256xbf16>, vector<16x256xbf16>, vector<16x16xf32> -> vector<16x16xf32>
    %13 = tpu.iota {dimensions = array<i32: 1>} : vector<16x16xi32>
    %c4_i32 = arith.constant 4 : i32
    %14 = vector.broadcast %c4_i32 : i32 to vector<16x16xi32>
    %15 = arith.cmpi slt, %13, %14 : vector<16x16xi32>
    %cst_8 = arith.constant -1.000000e+30 : f32
    %16 = vector.broadcast %cst_8 : f32 to vector<16x16xf32>
    %17 = arith.select %15, %12, %16 : vector<16x16xi1>, vector<16x16xf32>
    %cst_9 = arith.constant dense<0xFF800000> : vector<16xf32>
    %18 = vector.multi_reduction <maximumf>, %17, %cst_9 [1] : vector<16x16xf32> to vector<16xf32>
    %19 = vector.shape_cast %18 : vector<16xf32> to vector<16x1xf32>
    %20 = vector.broadcast %19 : vector<16x1xf32> to vector<16x16xf32>
    %21 = arith.subf %17, %20 : vector<16x16xf32>
    %22 = math.exp %21 : vector<16x16xf32>
    %cst_10 = arith.constant dense<0.000000e+00> : vector<16xf32>
    %23 = vector.multi_reduction <add>, %22, %cst_10 [1] : vector<16x16xf32> to vector<16xf32>
    %24 = vector.shape_cast %23 : vector<16xf32> to vector<16x1xf32>
    %25 = tpu.reciprocal %24 {approx = true} : vector<16x1xf32> -> vector<16x1xf32>
    %26 = vector.broadcast %25 : vector<16x1xf32> to vector<16x16xf32>
    %27 = arith.mulf %22, %26 : vector<16x16xf32>
    %28 = arith.truncf %27 : vector<16x16xf32> to vector<16x16xbf16>
    %cst_11 = arith.constant dense<0.000000e+00> : vector<16x256xf32>
    %29 = tpu.matmul %28, %11, %cst_11 {dimension_numbers = #tpu.dot_dimension_numbers<[0], [0], [1], [1], [0, 1, 1, 1], [], []>} : vector<16x16xbf16>, vector<16x256xbf16>, vector<16x256xf32> -> vector<16x256xf32>
    %c0_12 = arith.constant 0 : index
    %c0_13 = arith.constant 0 : index
    %30 = vector.load %arg4[%c0_12, %c0_13] : memref<32x16xbf16, #tpu.memory_space<vmem>>, vector<32x16xbf16>
    %31 = arith.truncf %29 : vector<16x256xf32> to vector<16x256xbf16>
    %cst_14 = arith.constant dense<0.000000e+00> : vector<32x256xf32>
    %32 = tpu.matmul %30, %31, %cst_14 {dimension_numbers = #tpu.dot_dimension_numbers<[1], [0], [0], [1], [0, 0, 1, 1], [], []>} : vector<32x16xbf16>, vector<16x256xbf16>, vector<32x256xf32> -> vector<32x256xf32>
    %c0_15 = arith.constant 0 : index
    %c0_16 = arith.constant 0 : index
    %33 = vector.load %arg5[%c0_15, %c0_16] : memref<32x1xf32, #tpu.memory_space<vmem>>, vector<32x1xf32>
    %34 = vector.broadcast %33 : vector<32x1xf32> to vector<32x256xf32>
    %35 = arith.addf %32, %34 : vector<32x256xf32>
    %36 = vector.broadcast %0 : f32 to vector<32x256xf32>
    %37 = arith.mulf %36, %35 : vector<32x256xf32>
    %c0_17 = arith.constant 0 : index
    %c0_18 = arith.constant 0 : index
    %c0_19 = arith.constant 0 : index
    %38 = vector.load %arg1[%c0_17, %c0_18, %c0_19] : memref<1x32x256xbf16, #tpu.memory_space<vmem>>, vector<1x32x256xbf16>
    %39 = vector.shape_cast %38 : vector<1x32x256xbf16> to vector<32x256xbf16>
    %40 = arith.extf %39 : vector<32x256xbf16> to vector<32x256xf32>
    %41 = arith.addf %37, %40 : vector<32x256xf32>
    %42 = arith.truncf %41 : vector<32x256xf32> to vector<32x256xbf16>
    %c0_20 = arith.constant 0 : index
    %c0_21 = arith.constant 0 : index
    %c0_22 = arith.constant 0 : index
    %43 = vector.load %arg7[%c0_20, %c0_21, %c0_22] : memref<1x32x256xbf16, #tpu.memory_space<vmem>>, vector<1x32x256xbf16>
    %44 = vector.shape_cast %43 : vector<1x32x256xbf16> to vector<32x256xbf16>
    %45 = vector.shape_cast %42 : vector<32x256xbf16> to vector<1x32x256xbf16>
    tpu.vector_store %arg7[%c0_20, %c0_21, %c0_22], %45 {strides = array<i32>} : memref<1x32x256xbf16, #tpu.memory_space<vmem>>, vector<1x32x256xbf16>,
    return
  }
  func.func @transform_0(%arg0: i32) -> (i32, i32, i32) {
    %c0_i32 = arith.constant 0 : i32
    %c0_i32_0 = arith.constant 0 : i32
    %c0_i32_1 = arith.constant 0 : i32
    return %arg0, %c0_i32, %c0_i32_0 : i32, i32, i32
  }
  func.func @transform_1(%arg0: i32) -> (i32, i32) {
    %c0_i32 = arith.constant 0 : i32
    %c0_i32_0 = arith.constant 0 : i32
    %c0_i32_1 = arith.constant 0 : i32
    return %c0_i32, %c0_i32_0 : i32, i32
  }
  func.func @transform_2(%arg0: i32) -> (i32, i32) {
    %c0_i32 = arith.constant 0 : i32
    %c0_i32_0 = arith.constant 0 : i32
    %c0_i32_1 = arith.constant 0 : i32
    return %c0_i32, %c0_i32_0 : i32, i32
  }
  func.func @transform_3(%arg0: i32) -> (i32, i32) {
    %c0_i32 = arith.constant 0 : i32
    %c0_i32_0 = arith.constant 0 : i32
    %c0_i32_1 = arith.constant 0 : i32
    return %c0_i32, %c0_i32_0 : i32, i32
  }
  func.func @transform_4(%arg0: i32) -> (i32, i32) {
    %c0_i32 = arith.constant 0 : i32
    %c0_i32_0 = arith.constant 0 : i32
    %c0_i32_1 = arith.constant 0 : i32
    return %c0_i32, %c0_i32_0 : i32, i32
  }
  func.func @transform_5(%arg0: i32) -> i32 {
    %c0_i32 = arith.constant 0 : i32
    %c0_i32_0 = arith.constant 0 : i32
    return %c0_i32 : i32
  }
  func.func @transform_6(%arg0: i32) -> (i32, i32, i32) {
    %c0_i32 = arith.constant 0 : i32
    %c0_i32_0 = arith.constant 0 : i32
    %c0_i32_1 = arith.constant 0 : i32
    return %arg0, %c0_i32, %c0_i32_0 : i32, i32, i32
  }
}

</mosaic_0001>

<llo_original>
// kernel: tpu_custom_call.1
$region0: #{tpu_custom_call.1}
  #allocation0 [shape = 'u32[]', space=smem, size = 0x4, offset = 0x4, fixed_abs, tag = 'smem constant byte address 0x4 - core index']
  #allocation1 [shape = 'u32[144,128]{1,0:T(1,128)}', space=vmem, size = 0x12000, scoped, tag = 'internal scratch']
  #allocation2 [shape = 'f32[1]{0:T(128)S(6)}', space=smem, size = 0x200, scoped, tag = 'scoped memory for tpu_custom_call.1']
  %s0 = inlined_call_operand.vmem [shape: bf16[2,32,256], index: 0, kind: input, shape index: {}]
  %s1 = inlined_call_operand.vmem [shape: bf16[48,32], index: 1, kind: input, shape index: {}]
  %s2 = inlined_call_operand.vmem [shape: f32[48,1], index: 2, kind: input, shape index: {}]
  %s3 = inlined_call_operand.vmem [shape: bf16[32,16], index: 3, kind: input, shape index: {}]
  %s4 = inlined_call_operand.vmem [shape: f32[32,1], index: 4, kind: input, shape index: {}]
  %s5 = inlined_call_operand.<no memory space> [shape: f32[1], index: 5, kind: input, shape index: {}]
  %s6 = inlined_call_operand.hbm [shape: bf16[2,32,256], index: 6, kind: output, shape index: {}]
  %s7 = sld [smem:[#allocation0]]
  $region57: #{tpu_custom_call.1} parent=0
    _
  %s9 = ssub.s32 1, %s7
  %s10 = scalar_select 0, %s9, %s7
  %11 = sst [smem:[#allocation2]] %s5
  $region1: #{tpu_custom_call.1} parent=0
    #allocation3 [shape = 'u8[32768]{0}', space=vmem, size = 0x8000, scoped, tag = 'output window, operand 0']
    #allocation4 [shape = 's32[2]{0}', space=sflag, size = 0x8, scoped, tag = 'scoped memory for tpu_custom_call.1']
    %12 = vsyncpa [#allocation4], 0
    %s13 = scalar_lea.sflag [#allocation4], 1
    %14 = vsyncpa %s13, 0
    loop: start=0, step=1, limit=4
    $region2: #{tpu_custom_call.1} parent=1 // loop_pre_header
      _
    $region3: #{tpu_custom_call.1} parent=1 // loop_header
      %s16 = sphi 0, %s20
      %p17 = scmp.ge.s32.totalorder %s16, 4
      %s26 = sphi 0, %s28
      %s29 = sphi 0, %s26
      %s30 = sphi 0, %s29
      %s46 = sphi 0, %s30
      %s50 = sphi 0, %s50
      %s52 = sphi 0, %s50
      %s53 = sphi 0, %s52
      %s67 = sphi 0, %s53
      %s71 = sphi 0, %s71
      %s73 = sphi 0, %s71
      %s74 = sphi 0, %s73
      %s88 = sphi 0, %s74
      %s92 = sphi 0, %s92
      %s94 = sphi 0, %s92
      %s95 = sphi 0, %s94
      %s109 = sphi 0, %s95
      %s113 = sphi 0, %s113
      %s115 = sphi 0, %s113
      %s116 = sphi 0, %s115
      %s130 = sphi 0, %s116
      %s134 = sphi 0, %s134
      %s136 = sphi 0, %s134
      %s137 = sphi 0, %s136
      %s151 = sphi 0, %s137
      %s157 = sphi 0, %s159
      %s160 = sphi 0, %s157
      %s161 = sphi 0, %s160
      %s177 = sphi 0, %s161
    $region4: #{tpu_custom_call.1} parent=1 // loop_header_branch
      %19 = sbr.rel (%p17) target = $region8
    $region5: #{tpu_custom_call.1} parent=1 // loop_body
      %s21 = ssub.s32 %s16, 1
      %s22 = ssub.s32 %s16, 2
      %s23 = sadd.s32 %s16, 1
      %s24 = ssub.s32 %s16, %s23
      %p25 = scmp.eq.s32.totalorder %s24, 0
      %s27 = sadd.s32 %s26, 1
      %s28 = scalar_select %p25, %s26, %s27
      %p31 = pneg %p25
      %p32 = scmp.eq.s32.totalorder %s16, 1
      %p33 = por %p31, %p32
      %p34 = scmp.ne.s32.totalorder %s26, %s29
      %p35 = scmp.eq.s32.totalorder %s16, 0
      %p36 = por %p34, %p35
      %p37 = scmp.ne.s32.totalorder %s26, %s29
      %p38 = scmp.eq.s32.totalorder %s21, 1
      %p39 = por %p37, %p38
      %p40 = scmp.ne.s32.totalorder %s29, %s30
      %p41 = scmp.eq.s32.totalorder %s21, 0
      %p42 = por %p40, %p41
      %p43 = scmp.ne.s32.totalorder %s29, %s30
      %p44 = scmp.eq.s32.totalorder %s22, 1
      %p45 = por %p43, %p44
      %p47 = scmp.ne.s32.totalorder %s30, %s46
      %p48 = scmp.eq.s32.totalorder %s22, 0
      %p49 = por %p47, %p48
      %s51 = sadd.s32 %s50, 1
      %p54 = scmp.eq.s32.totalorder %s16, 1
      %p55 = scmp.ne.s32.totalorder %s50, %s52
      %p56 = scmp.eq.s32.totalorder %s16, 0
      %p57 = por %p55, %p56
      %p58 = scmp.ne.s32.totalorder %s50, %s52
      %p59 = scmp.eq.s32.totalorder %s21, 1
      %p60 = por %p58, %p59
      %p61 = scmp.ne.s32.totalorder %s52, %s53
      %p62 = scmp.eq.s32.totalorder %s21, 0
      %p63 = por %p61, %p62
      %p64 = scmp.ne.s32.totalorder %s52, %s53
      %p65 = scmp.eq.s32.totalorder %s22, 1
      %p66 = por %p64, %p65
      %p68 = scmp.ne.s32.totalorder %s53, %s67
      %p69 = scmp.eq.s32.totalorder %s22, 0
      %p70 = por %p68, %p69
      %s72 = sadd.s32 %s71, 1
      %p75 = scmp.eq.s32.totalorder %s16, 1
      %p76 = scmp.ne.s32.totalorder %s71, %s73
      %p77 = scmp.eq.s32.totalorder %s16, 0
      %p78 = por %p76, %p77
      %p79 = scmp.ne.s32.totalorder %s71, %s73
      %p80 = scmp.eq.s32.totalorder %s21, 1
      %p81 = por %p79, %p80
      %p82 = scmp.ne.s32.totalorder %s73, %s74
      %p83 = scmp.eq.s32.totalorder %s21, 0
      %p84 = por %p82, %p83
      %p85 = scmp.ne.s32.totalorder %s73, %s74
      %p86 = scmp.eq.s32.totalorder %s22, 1
      %p87 = por %p85, %p86
      %p89 = scmp.ne.s32.totalorder %s74, %s88
      %p90 = scmp.eq.s32.totalorder %s22, 0
      %p91 = por %p89, %p90
      %s93 = sadd.s32 %s92, 1
      %p96 = scmp.eq.s32.totalorder %s16, 1
      %p97 = scmp.ne.s32.totalorder %s92, %s94
      %p98 = scmp.eq.s32.totalorder %s16, 0
      %p99 = por %p97, %p98
      %p100 = scmp.ne.s32.totalorder %s92, %s94
      %p101 = scmp.eq.s32.totalorder %s21, 1
      %p102 = por %p100, %p101
      %p103 = scmp.ne.s32.totalorder %s94, %s95
      %p104 = scmp.eq.s32.totalorder %s21, 0
      %p105 = por %p103, %p104
      %p106 = scmp.ne.s32.totalorder %s94, %s95
      %p107 = scmp.eq.s32.totalorder %s22, 1
      %p108 = por %p106, %p107
      %p110 = scmp.ne.s32.totalorder %s95, %s109
      %p111 = scmp.eq.s32.totalorder %s22, 0
      %p112 = por %p110, %p111
      %s114 = sadd.s32 %s113, 1
      %p117 = scmp.eq.s32.totalorder %s16, 1
      %p118 = scmp.ne.s32.totalorder %s113, %s115
      %p119 = scmp.eq.s32.totalorder %s16, 0
      %p120 = por %p118, %p119
      %p121 = scmp.ne.s32.totalorder %s113, %s115
      %p122 = scmp.eq.s32.totalorder %s21, 1
      %p123 = por %p121, %p122
      %p124 = scmp.ne.s32.totalorder %s115, %s116
      %p125 = scmp.eq.s32.totalorder %s21, 0
      %p126 = por %p124, %p125
      %p127 = scmp.ne.s32.totalorder %s115, %s116
      %p128 = scmp.eq.s32.totalorder %s22, 1
      %p129 = por %p127, %p128
      %p131 = scmp.ne.s32.totalorder %s116, %s130
      %p132 = scmp.eq.s32.totalorder %s22, 0
      %p133 = por %p131, %p132
      %s135 = sadd.s32 %s134, 1
      %p138 = scmp.eq.s32.totalorder %s16, 1
      %p139 = scmp.ne.s32.totalorder %s134, %s136
      %p140 = scmp.eq.s32.totalorder %s16, 0
      %p141 = por %p139, %p140
      %p142 = scmp.ne.s32.totalorder %s134, %s136
      %p143 = scmp.eq.s32.totalorder %s21, 1
      %p144 = por %p142, %p143
      %p145 = scmp.ne.s32.totalorder %s136, %s137
      %p146 = scmp.eq.s32.totalorder %s21, 0
      %p147 = por %p145, %p146
      %p148 = scmp.ne.s32.totalorder %s136, %s137
      %p149 = scmp.eq.s32.totalorder %s22, 1
      %p150 = por %p148, %p149
      %p152 = scmp.ne.s32.totalorder %s137, %s151
      %p153 = scmp.eq.s32.totalorder %s22, 0
      %p154 = por %p152, %p153
      %s155 = ssub.s32 %s16, %s23
      %p156 = scmp.eq.s32.totalorder %s155, 0
      %s158 = sadd.s32 %s157, 1
      %s159 = scalar_select %p156, %s157, %s158
      %p162 = pneg %p156
      %p163 = scmp.eq.s32.totalorder %s16, 1
      %p164 = por %p162, %p163
      %p165 = scmp.ne.s32.totalorder %s157, %s160
      %p166 = scmp.eq.s32.totalorder %s16, 0
      %p167 = por %p165, %p166
      %p168 = scmp.ne.s32.totalorder %s157, %s160
      %p169 = scmp.eq.s32.totalorder %s21, 1
      %p170 = por %p168, %p169
      %p171 = scmp.ne.s32.totalorder %s160, %s161
      %p172 = scmp.eq.s32.totalorder %s21, 0
      %p173 = por %p171, %p172
      %p174 = scmp.ne.s32.totalorder %s160, %s161
      %p175 = scmp.eq.s32.totalorder %s22, 1
      %p176 = por %p174, %p175
      %p178 = scmp.ne.s32.totalorder %s161, %s177
      %p179 = scmp.eq.s32.totalorder %s22, 0
      %p180 = por %p178, %p179
      %p181 = scmp.le.s32.totalorder 1, %s16
      %p182 = scmp.lt.s32.totalorder %s16, 3
      %p183 = pnand %p181, %p182
      %p184 = pneg %p183
      // Predicated region
      $region9: #{tpu_custom_call.1} parent=5 // pred_check
        _
      $region10: #{tpu_custom_call.1} parent=5 // pred_check_branch
        %186 = sbr.rel (%p183) target = $region12
      $region11: #{tpu_custom_call.1} parent=5 // pred_region
        %s187 = ssub.s32 %s16, 1
        // Predicated region
        $region13: #{tpu_custom_call.1} parent=11 // pred_check
          %p188 = pneg %p63
        $region14: #{tpu_custom_call.1} parent=11 // pred_check_branch
          %190 = sbr.rel (%p188) target = $region16
        $region15: #{tpu_custom_call.1} parent=11 // pred_region
          _
        $region16: #{tpu_custom_call.1} parent=11 // pred_fallthru
          _
        // Predicated region
        $region17: #{tpu_custom_call.1} parent=11 // pred_check
          %p191 = pneg %p84
        $region18: #{tpu_custom_call.1} parent=11 // pred_check_branch
          %193 = sbr.rel (%p191) target = $region20
        $region19: #{tpu_custom_call.1} parent=11 // pred_region
          _
        $region20: #{tpu_custom_call.1} parent=11 // pred_fallthru
          _
        // Predicated region
        $region21: #{tpu_custom_call.1} parent=11 // pred_check
          %p194 = pneg %p105
        $region22: #{tpu_custom_call.1} parent=11 // pred_check_branch
          %196 = sbr.rel (%p194) target = $region24
        $region23: #{tpu_custom_call.1} parent=11 // pred_region
          _
        $region24: #{tpu_custom_call.1} parent=11 // pred_fallthru
          _
        // Predicated region
        $region25: #{tpu_custom_call.1} parent=11 // pred_check
          %p197 = pneg %p126
        $region26: #{tpu_custom_call.1} parent=11 // pred_check_branch
          %199 = sbr.rel (%p197) target = $region28
        $region27: #{tpu_custom_call.1} parent=11 // pred_region
          _
        $region28: #{tpu_custom_call.1} parent=11 // pred_fallthru
          _
        // Predicated region
        $region29: #{tpu_custom_call.1} parent=11 // pred_check
          %p200 = pneg %p147
        $region30: #{tpu_custom_call.1} parent=11 // pred_check_branch
          %202 = sbr.rel (%p200) target = $region32
        $region31: #{tpu_custom_call.1} parent=11 // pred_region
          _
        $region32: #{tpu_custom_call.1} parent=11 // pred_fallthru
          _
      $region12: #{tpu_custom_call.1} parent=5 // pred_fallthru
        _
      %p203 = scmp.lt.s32.totalorder %s16, 2
      // Predicated region
      $region33: #{tpu_custom_call.1} parent=5 // pred_check
        %p204 = pneg %p203
      $region34: #{tpu_custom_call.1} parent=5 // pred_check_branch
        %206 = sbr.rel (%p204) target = $region36
      $region35: #{tpu_custom_call.1} parent=5 // pred_region
        // Predicated region
        $region37: #{tpu_custom_call.1} parent=35 // pred_check
          %p207 = pneg %p36
        $region38: #{tpu_custom_call.1} parent=35 // pred_check_branch
          %209 = sbr.rel (%p207) target = $region40
        $region39: #{tpu_custom_call.1} parent=35 // pred_region
          %p210 = scmp.lt.s32.totalorder %s16, 1
          %s211 = scalar_select %p210, %s16, 1
          %s212 = smul.addr %s211, 8
          %s213 = smul.addr %s212, 4
          %s214 = scalar_lea.vmem %s0, %s213
        $region40: #{tpu_custom_call.1} parent=35 // pred_fallthru
          _
      $region36: #{tpu_custom_call.1} parent=5 // pred_fallthru
        _
      %p215 = scmp.le.s32.totalorder 1, %s16
      %p216 = scmp.lt.s32.totalorder %s16, 3
      %p217 = pnand %p215, %p216
      %p218 = pneg %p217
      // Predicated region
      $region41: #{tpu_custom_call.1} parent=5 // pred_check
        _
      $region42: #{tpu_custom_call.1} parent=5 // pred_check_branch
        %220 = sbr.rel (%p217) target = $region44
      $region43: #{tpu_custom_call.1} parent=5 // pred_region
        %s221 = ssub.s32 %s16, 1
        %p222 = scmp.lt.s32.totalorder %s21, 1
        %s223 = scalar_select %p222, %s21, 1
        %s224 = smul.addr %s223, 8
        %s225 = smul.addr %s224, 4
        %s226 = scalar_lea.vmem %s0, %s225
        %p227 = pneg %p42
        %p228 = pneg %p39
        %p229 = pneg %p63
        %p230 = pneg %p60
        %p231 = pneg %p84
        %p232 = pneg %p81
        %p233 = pneg %p105
        %p234 = pneg %p102
        %p235 = pneg %p126
        %p236 = pneg %p123
        %p237 = pneg %p147
        %p238 = pneg %p144
        %p239 = pneg %p173
        %p240 = pneg %p170
        %s241 = sand.u32 %s160, 1
        %s242 = scalar_lea.sflag [#allocation4], %s241
        %s243 = sand.u32 %s160, 1
        %s244 = smul.addr %s243, 32
        %s245 = scalar_lea.vmem [#allocation3], %s244
        %p246 = scmp.lt.s32.totalorder %s21, 1
        %s247 = scalar_select %p246, %s21, 1
        %s248 = smul.addr %s247, 8
        %s249 = smul.addr %s248, 4
        %s250 = scalar_lea.vmem %s0, %s249
        %s252 = sld [smem:[#allocation2]]
        %v253 = vld [vmem:[%s250] sm:$0xff]
        %v254 = vld [vmem:[%s250 + $0x8] sm:$0xff]
        %v255 = vld [vmem:[%s250 + $0x10] sm:$0xff]
        %v256 = vld [vmem:[%s250 + $0x18] sm:$0xff]
        %v257 = vld [vmem:[%s1] sm:$0xf]
        %v258 = vld [vmem:[%s1 + $0x4] sm:$0xf]
        %v259 = vld [vmem:[%s1 + $0x8] sm:$0xf]
        %v260 = vld [vmem:[%s1 + $0xc] sm:$0xf]
        %v261 = vld [vmem:[%s1 + $0x10] sm:$0xf]
        %v262 = vld [vmem:[%s1 + $0x14] sm:$0xf]
        %v263 = vld [vmem:[%s2] sm:$0xff]
        %v264 = vld [vmem:[%s2 + $0x8] sm:$0xff]
        %v265 = vld [vmem:[%s2 + $0x10] sm:$0xff]
        %v266 = vld [vmem:[%s2 + $0x18] sm:$0xff]
        %v267 = vld [vmem:[%s2 + $0x20] sm:$0xff]
        %v268 = vld [vmem:[%s2 + $0x28] sm:$0xff]
        %270 = vset.pattern.permute.xlu0 0
        %271 = vperm.xlu0 %270, %v263
        %v272 = vpop.permute.xlu0 %271
        %275 = vset.pattern.permute.xlu0 0
        %276 = vperm.xlu0 %275, %v264
        %v277 = vpop.permute.xlu0 %276
        %280 = vset.pattern.permute.xlu0 0
        %281 = vperm.xlu0 %280, %v265
        %v282 = vpop.permute.xlu0 %281
        %285 = vset.pattern.permute.xlu0 0
        %286 = vperm.xlu0 %285, %v266
        %v287 = vpop.permute.xlu0 %286
        %290 = vset.pattern.permute.xlu0 0
        %291 = vperm.xlu0 %290, %v267
        %v292 = vpop.permute.xlu0 %291
        %295 = vset.pattern.permute.xlu0 0
        %296 = vperm.xlu0 %295, %v268
        %v297 = vpop.permute.xlu0 %296
        %v305 = vunpack.c.l.b16 %v257
        %v306 = vunpack.c.l.b16 %v258
        %v307 = vunpack.c.l.b16 %v259
        %v308 = vunpack.c.l.b16 %v260
        %v309 = vunpack.c.l.b16 %v261
        %v310 = vunpack.c.l.b16 %v262
        %v311 = vpack.c.b16 %v306, %v305
        %v312 = vpack.c.b16 %v308, %v307
        %v313 = vpack.c.b16 %v310, %v309
        %v318 = vunpack.c.l.b16 %v253
        %v319 = vunpack.c.h.b16 %v253
        %v320 = vunpack.c.l.b16 %v254
        %v321 = vunpack.c.h.b16 %v254
        %v322 = vunpack.c.l.b16 %v255
        %v323 = vunpack.c.h.b16 %v255
        %v324 = vunpack.c.l.b16 %v256
        %v325 = vunpack.c.h.b16 %v256
        %v326 = vpack.c.b16 %v320, %v318
        %v327 = vpack.c.b16 %v321, %v319
        %v328 = vpack.c.b16 %v324, %v322
        %v329 = vpack.c.b16 %v325, %v323
        %vm334 = vcmask 261120
        %v336 = vsel %vm334, %v311, 0
        %v339 = vsel %vm334, %v312, 0
        %v342 = vsel %vm334, %v313, 0
        %344 = vmatprep.subr.bf16.mxu0 %v327
        %345 = vmatpush1.bf16.msra.mxu0 %v326
        %346 = vmatprep.subr.bf16.mxu0 %v329
        %347 = vmatpush1.bf16.msra.mxu0 %v328
        %348 = vmatprep.subr.bf16.mxu0 0
        %349 = vmatpush1.bf16.msra.mxu0 0
        %350 = vmatprep.subr.bf16.mxu0 0
        %351 = vmatpush1.bf16.msra.mxu0 0
        %352 = vmatprep.subr.bf16.mxu0 0
        %353 = vmatpush1.bf16.msra.mxu0 0
        %354 = vmatprep.subr.bf16.mxu0 0
        %355 = vmatpush1.bf16.msra.mxu0 0
        %356 = vmatprep.subr.bf16.mxu0 0
        %357 = vmatpush1.bf16.msra.mxu0 0
        %358 = vmatprep.subr.bf16.mxu0 0
        %359 = vmatpush1.bf16.msra.mxu0 0
        %360 = vmatprep.subr.bf16.mxu0 0
        %361 = vmatpush1.bf16.msra.mxu0 0
        %362 = vmatprep.subr.bf16.mxu0 0
        %363 = vmatpush1.bf16.msra.mxu0 0
        %364 = vmatprep.subr.bf16.mxu0 0
        %365 = vmatpush1.bf16.msra.mxu0 0
        %366 = vmatprep.subr.bf16.mxu0 0
        %367 = vmatpush1.bf16.msra.mxu0 0
        %368 = vmatprep.subr.bf16.mxu0 0
        %369 = vmatpush1.bf16.msra.mxu0 0
        %370 = vmatprep.subr.bf16.mxu0 0
        %371 = vmatpush1.bf16.msra.mxu0 0
        %372 = vmatprep.subr.bf16.mxu0 0
        %373 = vmatpush1.bf16.msra.mxu0 0
        %374 = vmatprep.subr.bf16.mxu0 0
        %375 = vmatpush1.bf16.msra.mxu0 0
        %376 = vmatprep.mubr.bf16.mxu0 0
        %377 = vmatmul.mubr.bf16.gmra.mrb[0].mxu0 %v336
        %v378 = vpop.f32.mrb[0].mxu0
        %v379 = vadd.f32 %v272, %v378
        %v380 = vpop.f32.mrb[0].mxu0
        %v381 = vadd.f32 %v272, %v380
        %v382 = vpop.f32.mrb[0].mxu0
        %v383 = vadd.f32 %v277, %v382
        %v384 = vpop.f32.mrb[0].mxu0
        %v385 = vadd.f32 %v277, %v384
        %386 = vmatprep.mubr.bf16.mxu0 0
        %387 = vmatmul.mubr.bf16.gmra.mrb[0].mxu0 %v339
        %v388 = vpop.f32.mrb[0].mxu0
        %v389 = vadd.f32 %v282, %v388
        %v390 = vpop.f32.mrb[0].mxu0
        %v391 = vadd.f32 %v282, %v390
        %v392 = vpop.f32.mrb[0].mxu0
        %v393 = vadd.f32 %v287, %v392
        %v394 = vpop.f32.mrb[0].mxu0
        %v395 = vadd.f32 %v287, %v394
        %396 = vmatprep.mubr.bf16.mxu0 0
        %397 = vmatmul.mubr.bf16.gmra.mrb[0].mxu0 %v342
        %v398 = vpop.f32.mrb[0].mxu0
        %v399 = vadd.f32 %v292, %v398
        %v400 = vpop.f32.mrb[0].mxu0
        %v401 = vadd.f32 %v292, %v400
        %v402 = vpop.f32.mrb[0].mxu0
        %v403 = vadd.f32 %v297, %v402
        %v404 = vpop.f32.mrb[0].mxu0
        %v405 = vadd.f32 %v297, %v404
        %406 = vdwg.mxu0
        %v407 = vpack.c.bf16 %v383, %v379
        %v408 = vpack.c.bf16 %v385, %v381
        %v409 = vpack.c.bf16 %v393, %v389
        %v410 = vpack.c.bf16 %v395, %v391
        %v411 = vpack.c.bf16 %v403, %v399
        %v412 = vpack.c.bf16 %v405, %v401
        %413 = vmatprep.subr.bf16.mxu0 %v408
        %414 = vmatpush1.bf16.xpose.msra.mxu0 %v407
        %415 = vmatprep.subr.bf16.mxu0 0
        %416 = vmatpush1.bf16.xpose.msra.mxu0 0
        %417 = vmatprep.subr.bf16.mxu0 0
        %418 = vmatpush1.bf16.xpose.msra.mxu0 0
        %419 = vmatprep.subr.bf16.mxu0 0
        %420 = vmatpush1.bf16.xpose.msra.mxu0 0
        %421 = vmatprep.subr.bf16.mxu0 0
        %422 = vmatpush1.bf16.xpose.msra.mxu0 0
        %423 = vmatprep.subr.bf16.mxu0 0
        %424 = vmatpush1.bf16.xpose.msra.mxu0 0
        %425 = vmatprep.subr.bf16.mxu0 0
        %426 = vmatpush1.bf16.xpose.msra.mxu0 0
        %427 = vmatprep.subr.bf16.mxu0 0
        %428 = vmatpush1.bf16.xpose.msra.mxu0 0
        %429 = vmatprep.subr.bf16.mxu0 0
        %430 = vmatpush1.bf16.xpose.msra.mxu0 0
        %431 = vmatprep.subr.bf16.mxu0 0
        %432 = vmatpush1.bf16.xpose.msra.mxu0 0
        %433 = vmatprep.subr.bf16.mxu0 0
        %434 = vmatpush1.bf16.xpose.msra.mxu0 0
        %435 = vmatprep.subr.bf16.mxu0 0
        %436 = vmatpush1.bf16.xpose.msra.mxu0 0
        %437 = vmatprep.subr.bf16.mxu0 0
        %438 = vmatpush1.bf16.xpose.msra.mxu0 0
        %439 = vmatprep.subr.bf16.mxu0 0
        %440 = vmatpush1.bf16.xpose.msra.mxu0 0
        %441 = vmatprep.subr.bf16.mxu0 0
        %442 = vmatpush1.bf16.xpose.msra.mxu0 0
        %443 = vmatprep.subr.bf16.mxu0 0
        %444 = vmatpush1.bf16.xpose.msra.mxu0 0
        %445 = vmatprep.mubr.bf16.mxu0 %v410
        %446 = vmatmul.mubr.bf16.gmra.mrb[0].mxu0 %v409
        %v447 = vpop.f32.mrb[0].mxu0
        %v448 = vadd.f32 0.0, %v447
        %v449 = vpop.f32.mrb[0].mxu0
        %v450 = vpop.f32.mrb[0].mxu0
        %v451 = vadd.f32 0.0, %v450
        %v452 = vpop.f32.mrb[0].mxu0
        %453 = vdwg.mxu0
        %v454 = vlaneseq
        %v455 = vand.u32 %v454, 127
        %vm456 = vcmp.lt.s32.totalorder %v455, 4
        %v457 = vsel %vm456, %v448, -1e+30
        %v458 = vsel %vm456, %v451, -1e+30
        %vm459 = vcmask 130048
        %v460 = vsel %vm459, %v457, -inf
        %461 = vmax.xlane.f32.xlu0 %v460
        %v462 = vpop.xlane.xlu0 %461
        %v463 = vsel %vm459, %v458, -inf
        %464 = vmax.xlane.f32.xlu0 %v463
        %v465 = vpop.xlane.xlu0 %464
        %v466 = vsub.f32 %v457, %v462
        %v467 = vsub.f32 %v458, %v465
        %v468 = vmul.f32 %v466, 1.442695
        %v469 = vpow.pop %v468
        %v470 = vmul.f32 %v467, 1.442695
        %v471 = vpow.pop %v470
        %v472 = vsel %vm459, %v469, 0.0
        %473 = vadd.xlane.f32.xlu0 %v472
        %v474 = vpop.xlane.xlu0 %473
        %v475 = vsel %vm459, %v471, 0.0
        %476 = vadd.xlane.f32.xlu0 %v475
        %v477 = vpop.xlane.xlu0 %476
        %v478 = vrcp.pop %v474
        %v479 = vrcp.pop %v477
        %v480 = vmul.f32 %v469, %v478
        %v481 = vmul.f32 %v471, %v479
        %v482 = vpack.c.bf16 %v481, %v480
        %483 = vxpose.xlu0.c.b16.start [1/8] %v482, 128
        %484 = vxpose.xlu0.c.b16.cont [2/8] 0, 128
        %485 = vxpose.xlu0.c.b16.cont [3/8] 0, 128
        %486 = vxpose.xlu0.c.b16.cont [4/8] 0, 128
        %487 = vxpose.xlu0.c.b16.cont [5/8] 0, 128
        %488 = vxpose.xlu0.c.b16.cont [6/8] 0, 128
        %489 = vxpose.xlu0.c.b16.cont [7/8] 0, 128
        %490 = vxpose.xlu0.c.b16.end [8/8] 0, 128
        %v491 = vpop.trf.xlu0
        %v492 = vpop.trf.xlu0
        %v493 = vpop.trf.xlu0
        %v494 = vpop.trf.xlu0
        %v495 = vpop.trf.xlu0
        %v496 = vpop.trf.xlu0
        %v497 = vpop.trf.xlu0
        %v498 = vpop.trf.xlu0
        %v500 = vsel %vm459, %v491, 0
        %502 = vmatprep.subr.bf16.mxu0 %v412
        %503 = vmatpush1.bf16.msra.mxu0 %v411
        %504 = vmatprep.subr.bf16.mxu0 0
        %505 = vmatpush1.bf16.msra.mxu0 0
        %506 = vmatprep.subr.bf16.mxu0 0
        %507 = vmatpush1.bf16.msra.mxu0 0
        %508 = vmatprep.subr.bf16.mxu0 0
        %509 = vmatpush1.bf16.msra.mxu0 0
        %510 = vmatprep.subr.bf16.mxu0 0
        %511 = vmatpush1.bf16.msra.mxu0 0
        %512 = vmatprep.subr.bf16.mxu0 0
        %513 = vmatpush1.bf16.msra.mxu0 0
        %514 = vmatprep.subr.bf16.mxu0 0
        %515 = vmatpush1.bf16.msra.mxu0 0
        %516 = vmatprep.subr.bf16.mxu0 0
        %517 = vmatpush1.bf16.msra.mxu0 0
        %518 = vmatprep.subr.bf16.mxu0 0
        %519 = vmatpush1.bf16.msra.mxu0 0
        %520 = vmatprep.subr.bf16.mxu0 0
        %521 = vmatpush1.bf16.msra.mxu0 0
        %522 = vmatprep.subr.bf16.mxu0 0
        %523 = vmatpush1.bf16.msra.mxu0 0
        %524 = vmatprep.subr.bf16.mxu0 0
        %525 = vmatpush1.bf16.msra.mxu0 0
        %526 = vmatprep.subr.bf16.mxu0 0
        %527 = vmatpush1.bf16.msra.mxu0 0
        %528 = vmatprep.subr.bf16.mxu0 0
        %529 = vmatpush1.bf16.msra.mxu0 0
        %530 = vmatprep.subr.bf16.mxu0 0
        %531 = vmatpush1.bf16.msra.mxu0 0
        %532 = vmatprep.subr.bf16.mxu0 0
        %533 = vmatpush1.bf16.msra.mxu0 0
        %534 = vmatprep.mubr.bf16.mxu0 0
        %535 = vmatmul.mubr.bf16.gmra.mrb[0].mxu0 %v500
        %v536 = vpop.f32.mrb[0].mxu0
        %v537 = vadd.f32 0.0, %v536
        %v538 = vpop.f32.mrb[0].mxu0
        %v539 = vadd.f32 0.0, %v538
        %v540 = vpop.f32.mrb[0].mxu0
        %v541 = vadd.f32 0.0, %v540
        %v542 = vpop.f32.mrb[0].mxu0
        %v543 = vadd.f32 0.0, %v542
        %544 = vdwg.mxu0
        %v545 = vld [vmem:[%s3] sm:$0xf]
        %v546 = vld [vmem:[%s3 + $0x4] sm:$0xf]
        %v547 = vld [vmem:[%s3 + $0x8] sm:$0xf]
        %v548 = vld [vmem:[%s3 + $0xc] sm:$0xf]
        %v549 = vpack.c.bf16 %v541, %v537
        %v550 = vpack.c.bf16 %v543, %v539
        %v551 = vld [vmem:[%s4] sm:$0xff]
        %v552 = vld [vmem:[%s4 + $0x8] sm:$0xff]
        %v553 = vld [vmem:[%s4 + $0x10] sm:$0xff]
        %v554 = vld [vmem:[%s4 + $0x18] sm:$0xff]
        %556 = vset.pattern.permute.xlu0 0
        %557 = vperm.xlu0 %556, %v551
        %v558 = vpop.permute.xlu0 %557
        %561 = vset.pattern.permute.xlu0 0
        %562 = vperm.xlu0 %561, %v552
        %v563 = vpop.permute.xlu0 %562
        %566 = vset.pattern.permute.xlu0 0
        %567 = vperm.xlu0 %566, %v553
        %v568 = vpop.permute.xlu0 %567
        %571 = vset.pattern.permute.xlu0 0
        %572 = vperm.xlu0 %571, %v554
        %v573 = vpop.permute.xlu0 %572
        %v579 = vunpack.c.l.b16 %v545
        %v580 = vunpack.c.l.b16 %v546
        %v581 = vunpack.c.l.b16 %v547
        %v582 = vunpack.c.l.b16 %v548
        %v583 = vpack.c.b16 %v580, %v579
        %v584 = vpack.c.b16 %v582, %v581
        %v586 = vsel %vm459, %v583, 0
        %v589 = vsel %vm459, %v584, 0
        %591 = vmatprep.subr.bf16.mxu0 %v550
        %592 = vmatpush1.bf16.msra.mxu0 %v549
        %593 = vmatprep.subr.bf16.mxu0 0
        %594 = vmatpush1.bf16.msra.mxu0 0
        %595 = vmatprep.subr.bf16.mxu0 0
        %596 = vmatpush1.bf16.msra.mxu0 0
        %597 = vmatprep.subr.bf16.mxu0 0
        %598 = vmatpush1.bf16.msra.mxu0 0
        %599 = vmatprep.subr.bf16.mxu0 0
        %600 = vmatpush1.bf16.msra.mxu0 0
        %601 = vmatprep.subr.bf16.mxu0 0
        %602 = vmatpush1.bf16.msra.mxu0 0
        %603 = vmatprep.subr.bf16.mxu0 0
        %604 = vmatpush1.bf16.msra.mxu0 0
        %605 = vmatprep.subr.bf16.mxu0 0
        %606 = vmatpush1.bf16.msra.mxu0 0
        %607 = vmatprep.subr.bf16.mxu0 0
        %608 = vmatpush1.bf16.msra.mxu0 0
        %609 = vmatprep.subr.bf16.mxu0 0
        %610 = vmatpush1.bf16.msra.mxu0 0
        %611 = vmatprep.subr.bf16.mxu0 0
        %612 = vmatpush1.bf16.msra.mxu0 0
        %613 = vmatprep.subr.bf16.mxu0 0
        %614 = vmatpush1.bf16.msra.mxu0 0
        %615 = vmatprep.subr.bf16.mxu0 0
        %616 = vmatpush1.bf16.msra.mxu0 0
        %617 = vmatprep.subr.bf16.mxu0 0
        %618 = vmatpush1.bf16.msra.mxu0 0
        %619 = vmatprep.subr.bf16.mxu0 0
        %620 = vmatpush1.bf16.msra.mxu0 0
        %621 = vmatprep.subr.bf16.mxu0 0
        %622 = vmatpush1.bf16.msra.mxu0 0
        %623 = vmatprep.mubr.bf16.mxu0 0
        %624 = vmatmul.mubr.bf16.gmra.mrb[0].mxu0 %v586
        %v625 = vpop.f32.mrb[0].mxu0
        %v626 = vadd.f32 %v558, %v625
        %v627 = vpop.f32.mrb[0].mxu0
        %v628 = vadd.f32 %v558, %v627
        %v629 = vpop.f32.mrb[0].mxu0
        %v630 = vadd.f32 %v563, %v629
        %v631 = vpop.f32.mrb[0].mxu0
        %v632 = vadd.f32 %v563, %v631
        %633 = vmatprep.mubr.bf16.mxu0 0
        %634 = vmatmul.mubr.bf16.gmra.mrb[0].mxu0 %v589
        %v635 = vpop.f32.mrb[0].mxu0
        %v636 = vadd.f32 %v568, %v635
        %v637 = vpop.f32.mrb[0].mxu0
        %v638 = vadd.f32 %v568, %v637
        %v639 = vpop.f32.mrb[0].mxu0
        %v640 = vadd.f32 %v573, %v639
        %v641 = vpop.f32.mrb[0].mxu0
        %v642 = vadd.f32 %v573, %v641
        %643 = vdwg.mxu0
        %v644 = vstv %s252
        %v645 = vmul.f32 %v644, %v626
        %v646 = vmul.f32 %v644, %v628
        %v647 = vmul.f32 %v644, %v630
        %v648 = vmul.f32 %v644, %v632
        %v649 = vmul.f32 %v644, %v636
        %v650 = vmul.f32 %v644, %v638
        %v651 = vmul.f32 %v644, %v640
        %v652 = vmul.f32 %v644, %v642
        %v653 = vunpack.c.l.bf16 %v253
        %v654 = vunpack.c.h.bf16 %v253
        %v655 = vunpack.c.l.bf16 %v254
        %v656 = vunpack.c.h.bf16 %v254
        %v657 = vunpack.c.l.bf16 %v255
        %v658 = vunpack.c.h.bf16 %v255
        %v659 = vunpack.c.l.bf16 %v256
        %v660 = vunpack.c.h.bf16 %v256
        %v661 = vadd.f32 %v645, %v653
        %v662 = vadd.f32 %v646, %v654
        %v663 = vadd.f32 %v647, %v655
        %v664 = vadd.f32 %v648, %v656
        %v665 = vadd.f32 %v649, %v657
        %v666 = vadd.f32 %v650, %v658
        %v667 = vadd.f32 %v651, %v659
        %v668 = vadd.f32 %v652, %v660
        %v669 = vpack.c.bf16 %v663, %v661
        %v670 = vpack.c.bf16 %v664, %v662
        %v671 = vpack.c.bf16 %v667, %v665
        %v672 = vpack.c.bf16 %v668, %v666
        %v677 = vunpack.c.l.b16 %v669
        %v678 = vunpack.c.l.b16 %v670
        %v679 = vunpack.c.h.b16 %v669
        %v680 = vunpack.c.h.b16 %v670
        %v681 = vunpack.c.l.b16 %v671
        %v682 = vunpack.c.l.b16 %v672
        %v683 = vunpack.c.h.b16 %v671
        %v684 = vunpack.c.h.b16 %v672
        %v685 = vpack.c.b16 %v678, %v677
        %v686 = vpack.c.b16 %v680, %v679
        %v687 = vpack.c.b16 %v682, %v681
        %v688 = vpack.c.b16 %v684, %v683
        %693 = vst [vmem:[%s245] sm:$0xff] %v685
        %694 = vst [vmem:[%s245 + $0x8] sm:$0xff] %v686
        %695 = vst [vmem:[%s245 + $0x10] sm:$0xff] %v687
        %696 = vst [vmem:[%s245 + $0x18] sm:$0xff] %v688
        %s697 = sand.u32 %s160, 1
        %s698 = scalar_lea.sflag [#allocation4], %s697
        %s699 = sand.u32 %s160, 1
        %s700 = smul.addr %s699, 32
        %s701 = scalar_lea.vmem [#allocation3], %s700
        // Predicated region
        $region45: #{tpu_custom_call.1} parent=43 // pred_check
          %p702 = pneg %p170
        $region46: #{tpu_custom_call.1} parent=43 // pred_check_branch
          %704 = sbr.rel (%p702) target = $region48
        $region47: #{tpu_custom_call.1} parent=43 // pred_region
          %s706 = ssub.s32 512, 512
          %707 = vsyncadd %s698, %s706
          %s708 = smul.addr %s21, 8
          %s709 = smul.addr %s708, 64
          %s710 = scalar_lea.hbm %s6, %s709
          %s711 = sshll.u32 %s701, 4
          %s712 = int_to_ptr.vmem [resolvable:$true] %s711
          %717 = dma.vmem_to_hbm [thread:$0]  %s712, 512, %s710, %s698, 128, 128, 8
        $region48: #{tpu_custom_call.1} parent=43 // pred_fallthru
          _
      $region44: #{tpu_custom_call.1} parent=5 // pred_fallthru
        _
      %p718 = scmp.le.s32.totalorder 2, %s16
      // Predicated region
      $region49: #{tpu_custom_call.1} parent=5 // pred_check
        %p719 = pneg %p718
      $region50: #{tpu_custom_call.1} parent=5 // pred_check_branch
        %721 = sbr.rel (%p719) target = $region52
      $region51: #{tpu_custom_call.1} parent=5 // pred_region
        %s722 = ssub.s32 %s16, 2
        // Predicated region
        $region53: #{tpu_custom_call.1} parent=51 // pred_check
          %p723 = pneg %p176
        $region54: #{tpu_custom_call.1} parent=51 // pred_check_branch
          %725 = sbr.rel (%p723) target = $region56
        $region55: #{tpu_custom_call.1} parent=51 // pred_region
          %s726 = sand.u32 %s161, 1
          %s727 = scalar_lea.sflag [#allocation4], %s726
          %s728 = sand.u32 %s161, 1
          %s729 = smul.addr %s728, 32
          %s730 = scalar_lea.vmem [#allocation3], %s729
          %731 = dma.done %s727, 512
        $region56: #{tpu_custom_call.1} parent=51 // pred_fallthru
          _
      $region52: #{tpu_custom_call.1} parent=5 // pred_fallthru
        _
    $region6: #{tpu_custom_call.1} parent=1 // loop_footer
      %s20 = sadd.s32 1, %s16
    $region7: #{tpu_custom_call.1} parent=1 // loop_footer_branch
      %15 = sbr.rel target = $region3
    $region8: #{tpu_custom_call.1} parent=1 // loop_exit
      _
    %732 = vsyncpa [#allocation4], 1
    %s733 = scalar_lea.sflag [#allocation4], 1
    %734 = vsyncpa %s733, 1

</llo_original>
